<compile_context>
chip_gen: v7x
topology: tpu7x:2x2x1
jax: 0.10.0
libtpu: 0.0.40
codegen_flags: <defaults>
</compile_context>

<pallas_src>
import functools

import jax
import jax.numpy as jnp
from jax.experimental import pallas as pl
from jax.experimental.pallas import tpu as pltpu


def _round_up(x, m):
    return (x + m - 1) // m * m


def cnn_kernel(x_ref, w_ref, fcw_ref, fcb_ref, out_ref, *, K, L_out):
    """Pooled-first fused CNN forward.

    x_ref   : (TILE_N, C_in, L_lane)  f32  NCL input (conv-padded, lane-padded)
    w_ref   : (K, C_in, C_out_pad)    f32  conv weight / L_out, tap-major
    fcw_ref : (C_out_pad, NCLS_pad)   f32  fc weight (transposed, zero-padded)
    fcb_ref : (1, NCLS_pad)           f32  fc bias with conv bias folded in
    out_ref : (TILE_N, NCLS_pad)      f32  logits (padded lanes are zero)
    """
    x = x_ref[...]                                      # (TN, C_in, L_lane)
    pooled = None
    for t in range(K):                                  # K static -> unrolled
        # Windowed sum over the length (lane) axis for tap t: mean-pooling
        # commutes with the conv contraction, so this replaces the big
        # (N*L_out, C_in) x (C_in, C_out) matmuls of the naive formulation.
        s_t = jnp.sum(x[:, :, t:t + L_out], axis=-1)    # (TN, C_in)
        p_t = jnp.dot(s_t, w_ref[t],                    # (TN, C_out_pad)
                      preferred_element_type=jnp.float32)
        pooled = p_t if pooled is None else pooled + p_t
    out_ref[...] = (
        jnp.dot(pooled, fcw_ref[...], preferred_element_type=jnp.float32)
        + fcb_ref[...]
    )


def cnn_forward(x_ncl, conv_w, conv_b, fc_w, fc_b, *, tile_n=128):
    """x_ncl: (N, C_in, L) float32, PyTorch layout. Returns (N, num_classes)."""
    N, C_in, L = x_ncl.shape
    C_out, _, K = conv_w.shape
    num_classes = fc_w.shape[0]
    pad = K // 2
    L_out = L + 2 * pad - K + 1                         # matches PyTorch Conv1d
    L_lane = _round_up(L + 2 * pad, 128)                # lane-dense length axis
    c_out_p = _round_up(C_out, 128)
    ncls_p = _round_up(num_classes, 128)

    # Batch tile: multiple of 8 sublanes; keep double-buffered input block small.
    tile_n = min(_round_up(N, 8), tile_n)
    while tile_n > 8 and 2 * tile_n * C_in * L_lane * 4 > 16 * 1024 * 1024:
        tile_n //= 2
    n_pad = _round_up(N, tile_n)

    # Wrapper glue: conv "same" zero padding + lane/batch zero padding (NCL kept).
    x_p = jnp.pad(x_ncl.astype(jnp.float32),
                  ((0, n_pad - N), (0, 0), (pad, L_lane - L - pad)))

    # Conv weight -> (K, C_in, C_out_pad) with the 1/L_out of the mean folded in.
    w_kio = jnp.transpose(conv_w.astype(jnp.float32), (2, 1, 0)) / jnp.float32(L_out)
    w_kio = jnp.pad(w_kio, ((0, 0), (0, 0), (0, c_out_p - C_out)))

    # FC weight (transposed) + FC bias with conv bias folded in, lane-padded.
    fcw_t = jnp.pad(fc_w.T.astype(jnp.float32),
                    ((0, c_out_p - C_out), (0, ncls_p - num_classes)))
    fcb_fold = (fc_b.astype(jnp.float32)
                + fc_w.astype(jnp.float32) @ conv_b.astype(jnp.float32))
    fcb_p = jnp.pad(fcb_fold.reshape(1, num_classes),
                    ((0, 0), (0, ncls_p - num_classes)))

    out = pl.pallas_call(
        functools.partial(cnn_kernel, K=K, L_out=L_out),
        out_shape=jax.ShapeDtypeStruct((n_pad, ncls_p), jnp.float32),
        grid=(n_pad // tile_n,),
        in_specs=[
            pl.BlockSpec((tile_n, C_in, L_lane), lambda i: (i, 0, 0)),
            pl.BlockSpec((K, C_in, c_out_p), lambda i: (0, 0, 0)),
            pl.BlockSpec((c_out_p, ncls_p), lambda i: (0, 0)),
            pl.BlockSpec((1, ncls_p), lambda i: (0, 0)),
        ],
        out_specs=pl.BlockSpec((tile_n, ncls_p), lambda i: (i, 0)),
        compiler_params=pltpu.CompilerParams(
            dimension_semantics=("parallel",),
            vmem_limit_bytes=48 * 1024 * 1024,
        ),
    )(x_p, w_kio, fcw_t, fcb_p)
    return out[:N, :num_classes]


def cnn_reference(x_ncl, conv_w, conv_b, fc_w, fc_b):
    """Pure-JAX reference matching torch semantics (NCL conv, 'same' padding)."""
    K = conv_w.shape[2]
    pad = K // 2
    conv = jax.lax.conv_general_dilated(
        x_ncl, conv_w, window_strides=(1,), padding=[(pad, pad)],
        dimension_numbers=("NCH", "OIH", "NCH"))
    conv = conv + conv_b.reshape(1, -1, 1)
    pooled = jnp.mean(conv, axis=2)                     # AdaptiveAvgPool1d(1).squeeze(-1)
    return pooled @ fc_w.T + fc_b


if __name__ == "__main__":
    # Small shapes consistent with the module.
    N, C_in, L = 2, 4, 16
    C_out, K, NUM_CLASSES = 8, 3, 3

    key = jax.random.PRNGKey(0)
    kx, kw, kb, kfw, kfb = jax.random.split(key, 5)

    x = jax.random.normal(kx, (N, C_in, L), dtype=jnp.float32)
    conv_w = jax.random.normal(kw, (C_out, C_in, K), dtype=jnp.float32) * 0.1
    conv_b = jax.random.normal(kb, (C_out,), dtype=jnp.float32) * 0.1
    fc_w = jax.random.normal(kfw, (NUM_CLASSES, C_out), dtype=jnp.float32) * 0.1
    fc_b = jax.random.normal(kfb, (NUM_CLASSES,), dtype=jnp.float32) * 0.1

    out = jax.block_until_ready(cnn_forward(x, conv_w, conv_b, fc_w, fc_b))
    ref = jax.block_until_ready(cnn_reference(x, conv_w, conv_b, fc_w, fc_b))

    assert out.shape == (N, NUM_CLASSES)
    assert jnp.allclose(out, ref, atol=1e-5, rtol=1e-5), (out, ref)

    print("KERNEL_OK")
</pallas_src>

<mosaic_0001>
module attributes {stable_mosaic.version = 11 : i64} {
  func.func @cnn_kernel(%arg0: i32, %arg1: memref<8x4x128xf32, #tpu.memory_space<vmem>>, %arg2: memref<3x4x128xf32, #tpu.memory_space<vmem>>, %arg3: memref<128x128xf32, #tpu.memory_space<vmem>>, %arg4: memref<1x128xf32, #tpu.memory_space<vmem>>, %arg5: memref<8x128xf32, #tpu.memory_space<vmem>>) attributes {dimension_semantics = [#tpu.dimension_semantics<parallel>], iteration_bounds = array<i64: 1>, scalar_prefetch = 0 : i64, scratch_operands = 0 : i64, tpu.core_type = #tpu.core_type<tc>, window_params = [{transform_indices = @transform_0, window_bounds = array<i64: 8, 4, 128>}, {pipeline_mode = #tpu.pipeline_mode<synchronous>, transform_indices = @transform_1, window_bounds = array<i64: 3, 4, 128>}, {pipeline_mode = #tpu.pipeline_mode<synchronous>, transform_indices = @transform_2, window_bounds = array<i64: 128, 128>}, {pipeline_mode = #tpu.pipeline_mode<synchronous>, transform_indices = @transform_3, window_bounds = array<i64: 1, 128>}, {transform_indices = @transform_4, window_bounds = array<i64: 8, 128>}]} {
    %c0 = arith.constant 0 : index
    %c0_0 = arith.constant 0 : index
    %c0_1 = arith.constant 0 : index
    %0 = vector.load %arg1[%c0, %c0_0, %c0_1] : memref<8x4x128xf32, #tpu.memory_space<vmem>>, vector<8x4x128xf32>
    %1 = vector.extract_strided_slice %0 {offsets = [0, 0, 0], sizes = [8, 4, 16], strides = [1, 1, 1]} : vector<8x4x128xf32> to vector<8x4x16xf32>
    %cst = arith.constant dense<0.000000e+00> : vector<8x4xf32>
    %2 = vector.multi_reduction <add>, %1, %cst [2] : vector<8x4x16xf32> to vector<8x4xf32>
    %c0_2 = arith.constant 0 : index
    %c0_3 = arith.constant 0 : index
    %c0_4 = arith.constant 0 : index
    %3 = vector.load %arg2[%c0_2, %c0_3, %c0_4] : memref<3x4x128xf32, #tpu.memory_space<vmem>>, vector<1x4x128xf32>
    %4 = vector.shape_cast %3 : vector<1x4x128xf32> to vector<4x128xf32>
    %cst_5 = arith.constant dense<0.000000e+00> : vector<8x128xf32>
    %5 = tpu.matmul %2, %4, %cst_5 {dimension_numbers = #tpu.dot_dimension_numbers<[1], [0], [0], [1], [0, 0, 1, 1], [], []>} : vector<8x4xf32>, vector<4x128xf32>, vector<8x128xf32> -> vector<8x128xf32>
    %6 = vector.extract_strided_slice %0 {offsets = [0, 0, 1], sizes = [8, 4, 16], strides = [1, 1, 1]} : vector<8x4x128xf32> to vector<8x4x16xf32>
    %cst_6 = arith.constant dense<0.000000e+00> : vector<8x4xf32>
    %7 = vector.multi_reduction <add>, %6, %cst_6 [2] : vector<8x4x16xf32> to vector<8x4xf32>
    %c1 = arith.constant 1 : index
    %c0_7 = arith.constant 0 : index
    %c0_8 = arith.constant 0 : index
    %8 = vector.load %arg2[%c1, %c0_7, %c0_8] : memref<3x4x128xf32, #tpu.memory_space<vmem>>, vector<1x4x128xf32>
    %9 = vector.shape_cast %8 : vector<1x4x128xf32> to vector<4x128xf32>
    %cst_9 = arith.constant dense<0.000000e+00> : vector<8x128xf32>
    %10 = tpu.matmul %7, %9, %cst_9 {dimension_numbers = #tpu.dot_dimension_numbers<[1], [0], [0], [1], [0, 0, 1, 1], [], []>} : vector<8x4xf32>, vector<4x128xf32>, vector<8x128xf32> -> vector<8x128xf32>
    %11 = arith.addf %5, %10 : vector<8x128xf32>
    %12 = vector.extract_strided_slice %0 {offsets = [0, 0, 2], sizes = [8, 4, 16], strides = [1, 1, 1]} : vector<8x4x128xf32> to vector<8x4x16xf32>
    %cst_10 = arith.constant dense<0.000000e+00> : vector<8x4xf32>
    %13 = vector.multi_reduction <add>, %12, %cst_10 [2] : vector<8x4x16xf32> to vector<8x4xf32>
    %c2 = arith.constant 2 : index
    %c0_11 = arith.constant 0 : index
    %c0_12 = arith.constant 0 : index
    %14 = vector.load %arg2[%c2, %c0_11, %c0_12] : memref<3x4x128xf32, #tpu.memory_space<vmem>>, vector<1x4x128xf32>
    %15 = vector.shape_cast %14 : vector<1x4x128xf32> to vector<4x128xf32>
    %cst_13 = arith.constant dense<0.000000e+00> : vector<8x128xf32>
    %16 = tpu.matmul %13, %15, %cst_13 {dimension_numbers = #tpu.dot_dimension_numbers<[1], [0], [0], [1], [0, 0, 1, 1], [], []>} : vector<8x4xf32>, vector<4x128xf32>, vector<8x128xf32> -> vector<8x128xf32>
    %17 = arith.addf %11, %16 : vector<8x128xf32>
    %c0_14 = arith.constant 0 : index
    %c0_15 = arith.constant 0 : index
    %18 = vector.load %arg3[%c0_14, %c0_15] : memref<128x128xf32, #tpu.memory_space<vmem>>, vector<128x128xf32>
    %cst_16 = arith.constant dense<0.000000e+00> : vector<8x128xf32>
    %19 = tpu.matmul %17, %18, %cst_16 {dimension_numbers = #tpu.dot_dimension_numbers<[1], [0], [0], [1], [0, 0, 1, 1], [], []>} : vector<8x128xf32>, vector<128x128xf32>, vector<8x128xf32> -> vector<8x128xf32>
    %c0_17 = arith.constant 0 : index
    %c0_18 = arith.constant 0 : index
    %20 = vector.load %arg4[%c0_17, %c0_18] : memref<1x128xf32, #tpu.memory_space<vmem>>, vector<1x128xf32>
    %21 = vector.broadcast %20 : vector<1x128xf32> to vector<8x128xf32>
    %22 = arith.addf %19, %21 : vector<8x128xf32>
    %c0_19 = arith.constant 0 : index
    %c0_20 = arith.constant 0 : index
    %23 = vector.load %arg5[%c0_19, %c0_20] : memref<8x128xf32, #tpu.memory_space<vmem>>, vector<8x128xf32>
    tpu.vector_store %arg5[%c0_19, %c0_20], %22 {strides = array<i32>} : memref<8x128xf32, #tpu.memory_space<vmem>>, vector<8x128xf32>,
    return
  }
  func.func @transform_0(%arg0: i32) -> (i32, i32, i32) {
    %c0_i32 = arith.constant 0 : i32
    %c0_i32_0 = arith.constant 0 : i32
    %c0_i32_1 = arith.constant 0 : i32
    return %arg0, %c0_i32, %c0_i32_0 : i32, i32, i32
  }
  func.func @transform_1(%arg0: i32) -> (i32, i32, i32) {
    %c0_i32 = arith.constant 0 : i32
    %c0_i32_0 = arith.constant 0 : i32
    %c0_i32_1 = arith.constant 0 : i32
    %c0_i32_2 = arith.constant 0 : i32
    return %c0_i32, %c0_i32_0, %c0_i32_1 : i32, i32, i32
  }
  func.func @transform_2(%arg0: i32) -> (i32, i32) {
    %c0_i32 = arith.constant 0 : i32
    %c0_i32_0 = arith.constant 0 : i32
    %c0_i32_1 = arith.constant 0 : i32
    return %c0_i32, %c0_i32_0 : i32, i32
  }
  func.func @transform_3(%arg0: i32) -> (i32, i32) {
    %c0_i32 = arith.constant 0 : i32
    %c0_i32_0 = arith.constant 0 : i32
    %c0_i32_1 = arith.constant 0 : i32
    return %c0_i32, %c0_i32_0 : i32, i32
  }
  func.func @transform_4(%arg0: i32) -> (i32, i32) {
    %c0_i32 = arith.constant 0 : i32
    %c0_i32_0 = arith.constant 0 : i32
    return %arg0, %c0_i32 : i32, i32
  }
}

</mosaic_0001>

<llo_original>
// kernel: tpu_custom_call.1
$region0: #{tpu_custom_call.1}
  #allocation0 [shape = 'u32[]', space=smem, size = 0x4, offset = 0x4, fixed_abs, tag = 'smem constant byte address 0x4 - core index']
  #allocation1 [shape = 'u32[144,128]{1,0:T(1,128)}', space=vmem, size = 0x12000, scoped, tag = 'internal scratch']
  %s0 = inlined_call_operand.hbm [shape: f32[8,4,128], index: 0, kind: input, shape index: {}]
  %s1 = inlined_call_operand.hbm [shape: f32[3,4,128], index: 1, kind: input, shape index: {}]
  %s2 = inlined_call_operand.hbm [shape: f32[128,128], index: 2, kind: input, shape index: {}]
  %s3 = inlined_call_operand.vmem [shape: f32[1,128], index: 3, kind: input, shape index: {}]
  %s4 = inlined_call_operand.hbm [shape: f32[8,128], index: 4, kind: output, shape index: {}]
  %s5 = sld [smem:[#allocation0]]
  $region38: #{tpu_custom_call.1} parent=0
    _
  %s7 = ssub.s32 1, %s5
  %s8 = scalar_select 0, %s7, %s5
  $region1: #{tpu_custom_call.1} parent=0
    #allocation2 [shape = 'u8[16384]{0}', space=vmem, size = 0x4000, scoped, tag = 'input window, operand 0, single buffered']
    #allocation3 [shape = 's32[1]{0}', space=sflag, size = 0x4, scoped, tag = 'scoped memory for tpu_custom_call.1']
    #allocation4 [shape = 's32[1]{0}', space=sflag, size = 0x4, scoped, tag = 'scoped memory for tpu_custom_call.1']
    #allocation5 [shape = 'u8[6144]{0}', space=vmem, size = 0x1800, scoped, tag = 'input window, operand 1, single buffered']
    #allocation6 [shape = 's32[1]{0}', space=sflag, size = 0x4, scoped, tag = 'scoped memory for tpu_custom_call.1']
    #allocation7 [shape = 'u8[65536]{0}', space=vmem, size = 0x10000, scoped, tag = 'input window, operand 2, single buffered']
    #allocation8 [shape = 'u8[4096]{0}', space=vmem, size = 0x1000, scoped, tag = 'output window, operand 0, single buffered']
    %9 = vsyncpa [#allocation3], 0
    %10 = vsyncpa [#allocation6], 0
    %11 = vsyncpa [#allocation4], 0
    // Predicated region
    $region2: #{tpu_custom_call.1} parent=1 // pred_check
      _
    $region3: #{tpu_custom_call.1} parent=1 // pred_check_branch
      %13 = sbr.rel (0) target = $region5
    $region4: #{tpu_custom_call.1} parent=1 // pred_region
      %s15 = ssub.s32 512, 512
      %16 = vsyncadd [#allocation3], %s15
      %s17 = sshll.u32 [#allocation2], 4
      %s18 = int_to_ptr.vmem [resolvable:$true] %s17
      %23 = dma.hbm_to_vmem [thread:$0]  %s0, 512, %s18, [#allocation3], 64, 64, 4
    $region5: #{tpu_custom_call.1} parent=1 // pred_fallthru
      _
    // Predicated region
    $region6: #{tpu_custom_call.1} parent=1 // pred_check
      _
    $region7: #{tpu_custom_call.1} parent=1 // pred_check_branch
      %25 = sbr.rel (0) target = $region9
    $region8: #{tpu_custom_call.1} parent=1 // pred_region
      %s27 = ssub.s32 192, 192
      %28 = vsyncadd [#allocation6], %s27
      %s29 = sshll.u32 [#allocation5], 4
      %s30 = int_to_ptr.vmem [resolvable:$true] %s29
      %35 = dma.hbm_to_vmem [thread:$0]  %s1, 192, %s30, [#allocation6], 64, 64, 4
    $region9: #{tpu_custom_call.1} parent=1 // pred_fallthru
      _
    // Predicated region
    $region10: #{tpu_custom_call.1} parent=1 // pred_check
      _
    $region11: #{tpu_custom_call.1} parent=1 // pred_check_branch
      %37 = sbr.rel (0) target = $region13
    $region12: #{tpu_custom_call.1} parent=1 // pred_region
      %s39 = ssub.s32 2048, 2048
      %40 = vsyncadd [#allocation6], %s39
      %s41 = sshll.u32 [#allocation7], 4
      %s42 = int_to_ptr.vmem [resolvable:$true] %s41
      %47 = dma.hbm_to_vmem [thread:$0]  %s2, 2048, %s42, [#allocation6], 128, 128, 8
    $region13: #{tpu_custom_call.1} parent=1 // pred_fallthru
      _
    // Predicated region
    $region14: #{tpu_custom_call.1} parent=1 // pred_check
      _
    $region15: #{tpu_custom_call.1} parent=1 // pred_check_branch
      %49 = sbr.rel (0) target = $region17
    $region16: #{tpu_custom_call.1} parent=1 // pred_region
      _
    $region17: #{tpu_custom_call.1} parent=1 // pred_fallthru
      _
    // Predicated region
    $region18: #{tpu_custom_call.1} parent=1 // pred_check
      _
    $region19: #{tpu_custom_call.1} parent=1 // pred_check_branch
      %51 = sbr.rel (0) target = $region21
    $region20: #{tpu_custom_call.1} parent=1 // pred_region
      %52 = dma.done [#allocation3], 512
    $region21: #{tpu_custom_call.1} parent=1 // pred_fallthru
      _
    // Predicated region
    $region22: #{tpu_custom_call.1} parent=1 // pred_check
      _
    $region23: #{tpu_custom_call.1} parent=1 // pred_check_branch
      %54 = sbr.rel (0) target = $region25
    $region24: #{tpu_custom_call.1} parent=1 // pred_region
      %55 = dma.done [#allocation6], 192
    $region25: #{tpu_custom_call.1} parent=1 // pred_fallthru
      _
    // Predicated region
    $region26: #{tpu_custom_call.1} parent=1 // pred_check
      _
    $region27: #{tpu_custom_call.1} parent=1 // pred_check_branch
      %57 = sbr.rel (0) target = $region29
    $region28: #{tpu_custom_call.1} parent=1 // pred_region
      %58 = dma.done [#allocation6], 2048
    $region29: #{tpu_custom_call.1} parent=1 // pred_fallthru
      _
    %v59 = vld [vmem:[#allocation2] sm:$0xf]
    %v60 = vld [vmem:[#allocation2 + $0x4] sm:$0xf]
    %v61 = vld [vmem:[#allocation2 + $0x8] sm:$0xf]
    %v62 = vld [vmem:[#allocation2 + $0xc] sm:$0xf]
    %v63 = vld [vmem:[#allocation2 + $0x10] sm:$0xf]
    %v64 = vld [vmem:[#allocation2 + $0x14] sm:$0xf]
    %v65 = vld [vmem:[#allocation2 + $0x18] sm:$0xf]
    %v66 = vld [vmem:[#allocation2 + $0x1c] sm:$0xf]
    %vm67 = vcmask 125952
    %v68 = vsel %vm67, %v59, 0.0
    %69 = vadd.xlane.f32.xlu0 %v68
    %v70 = vpop.xlane.xlu0 %69
    %v71 = vsel %vm67, %v60, 0.0
    %72 = vadd.xlane.f32.xlu0 %v71
    %v73 = vpop.xlane.xlu0 %72
    %v74 = vsel %vm67, %v61, 0.0
    %75 = vadd.xlane.f32.xlu0 %v74
    %v76 = vpop.xlane.xlu0 %75
    %v77 = vsel %vm67, %v62, 0.0
    %78 = vadd.xlane.f32.xlu0 %v77
    %v79 = vpop.xlane.xlu0 %78
    %v80 = vsel %vm67, %v63, 0.0
    %81 = vadd.xlane.f32.xlu0 %v80
    %v82 = vpop.xlane.xlu0 %81
    %v83 = vsel %vm67, %v64, 0.0
    %84 = vadd.xlane.f32.xlu0 %v83
    %v85 = vpop.xlane.xlu0 %84
    %v86 = vsel %vm67, %v65, 0.0
    %87 = vadd.xlane.f32.xlu0 %v86
    %v88 = vpop.xlane.xlu0 %87
    %v89 = vsel %vm67, %v66, 0.0
    %90 = vadd.xlane.f32.xlu0 %v89
    %v91 = vpop.xlane.xlu0 %90
    %v92 = vld [vmem:[#allocation5] sm:$0xf]
    %101 = vrot.lane.b32.xlu0 %v59, 127
    %v102 = vpop.permute.xlu0 %101
    %103 = vrot.lane.b32.xlu0 %v60, 127
    %v104 = vpop.permute.xlu0 %103
    %105 = vrot.lane.b32.xlu0 %v61, 127
    %v106 = vpop.permute.xlu0 %105
    %107 = vrot.lane.b32.xlu0 %v62, 127
    %v108 = vpop.permute.xlu0 %107
    %109 = vrot.lane.b32.xlu0 %v63, 127
    %v110 = vpop.permute.xlu0 %109
    %111 = vrot.lane.b32.xlu0 %v64, 127
    %v112 = vpop.permute.xlu0 %111
    %113 = vrot.lane.b32.xlu0 %v65, 127
    %v114 = vpop.permute.xlu0 %113
    %115 = vrot.lane.b32.xlu0 %v66, 127
    %v116 = vpop.permute.xlu0 %115
    %v125 = vsel %vm67, %v102, 0.0
    %126 = vadd.xlane.f32.xlu0 %v125
    %v127 = vpop.xlane.xlu0 %126
    %v128 = vsel %vm67, %v104, 0.0
    %129 = vadd.xlane.f32.xlu0 %v128
    %v130 = vpop.xlane.xlu0 %129
    %v131 = vsel %vm67, %v106, 0.0
    %132 = vadd.xlane.f32.xlu0 %v131
    %v133 = vpop.xlane.xlu0 %132
    %v134 = vsel %vm67, %v108, 0.0
    %135 = vadd.xlane.f32.xlu0 %v134
    %v136 = vpop.xlane.xlu0 %135
    %v137 = vsel %vm67, %v110, 0.0
    %138 = vadd.xlane.f32.xlu0 %v137
    %v139 = vpop.xlane.xlu0 %138
    %v140 = vsel %vm67, %v112, 0.0
    %141 = vadd.xlane.f32.xlu0 %v140
    %v142 = vpop.xlane.xlu0 %141
    %v143 = vsel %vm67, %v114, 0.0
    %144 = vadd.xlane.f32.xlu0 %v143
    %v145 = vpop.xlane.xlu0 %144
    %v146 = vsel %vm67, %v116, 0.0
    %147 = vadd.xlane.f32.xlu0 %v146
    %v148 = vpop.xlane.xlu0 %147
    %s149 = scalar_lea.vmem [#allocation5], 4
    %v150 = vld [vmem:[%s149] sm:$0xf]
    %v159 = vlaneseq
    %v160 = vand.u32 %v159, 127
    %v161 = vlaneseq
    %v162 = vshrl.u32 %v161, 7
    %v163 = vsub.s32 %v160, %v162
    %v164 = vrot.slane %v127, %v163
    %v165 = vlaneseq
    %v166 = vshrl.u32 %v165, 7
    %v167 = vsub.s32 %v160, %v166
    %v168 = vrot.slane %v130, %v167
    %v169 = vlaneseq
    %v170 = vshrl.u32 %v169, 7
    %v171 = vsub.s32 %v160, %v170
    %v172 = vrot.slane %v133, %v171
    %v173 = vlaneseq
    %v174 = vshrl.u32 %v173, 7
    %v175 = vsub.s32 %v160, %v174
    %v176 = vrot.slane %v136, %v175
    %v177 = vlaneseq
    %v178 = vshrl.u32 %v177, 7
    %v179 = vsub.s32 %v160, %v178
    %v180 = vrot.slane %v139, %v179
    %v181 = vlaneseq
    %v182 = vshrl.u32 %v181, 7
    %v183 = vsub.s32 %v160, %v182
    %v184 = vrot.slane %v142, %v183
    %v185 = vlaneseq
    %v186 = vshrl.u32 %v185, 7
    %v187 = vsub.s32 %v160, %v186
    %v188 = vrot.slane %v145, %v187
    %v189 = vlaneseq
    %v190 = vshrl.u32 %v189, 7
    %v191 = vsub.s32 %v160, %v190
    %v192 = vrot.slane %v148, %v191
    %vm193 = vcmask 1041409
    %v194 = vsel %vm193, %v168, %v164
    %vm195 = vcmask 1042434
    %v196 = vsel %vm195, %v172, %v194
    %vm197 = vcmask 1043459
    %v198 = vsel %vm197, %v176, %v196
    %vm199 = vcmask 1044484
    %v200 = vsel %vm199, %v180, %v198
    %vm201 = vcmask 1045509
    %v202 = vsel %vm201, %v184, %v200
    %vm203 = vcmask 1046534
    %v204 = vsel %vm203, %v188, %v202
    %vm205 = vcmask 1047559
    %v206 = vsel %vm205, %v192, %v204
    %vm207 = vcmask 31744
    %v208 = vsel %vm207, %v206, 0
    %vm210 = vcmask 1043456
    %v212 = vsel %vm210, %v150, 0
    %214 = vmatprep.subr.mxu0 0.0
    %215 = vmatpush1.msra.mxu0 %v212
    %216 = vmatprep.subr.mxu0 0.0
    %217 = vmatpush1.msra.mxu0 0.0
    %218 = vmatprep.subr.mxu0 0.0
    %219 = vmatpush1.msra.mxu0 0.0
    %220 = vmatprep.subr.mxu0 0.0
    %221 = vmatpush1.msra.mxu0 0.0
    %222 = vmatprep.subr.mxu0 0.0
    %223 = vmatpush1.msra.mxu0 0.0
    %224 = vmatprep.subr.mxu0 0.0
    %225 = vmatpush1.msra.mxu0 0.0
    %226 = vmatprep.subr.mxu0 0.0
    %227 = vmatpush1.msra.mxu0 0.0
    %228 = vmatprep.subr.mxu0 0.0
    %229 = vmatpush1.msra.mxu0 0.0
    %230 = vmatprep.subr.mxu0 0.0
    %231 = vmatpush1.msra.mxu0 0.0
    %232 = vmatprep.subr.mxu0 0.0
    %233 = vmatpush1.msra.mxu0 0.0
    %234 = vmatprep.subr.mxu0 0.0
    %235 = vmatpush1.msra.mxu0 0.0
    %236 = vmatprep.subr.mxu0 0.0
    %237 = vmatpush1.msra.mxu0 0.0
    %238 = vmatprep.subr.mxu0 0.0
    %239 = vmatpush1.msra.mxu0 0.0
    %240 = vmatprep.subr.mxu0 0.0
    %241 = vmatpush1.msra.mxu0 0.0
    %242 = vmatprep.subr.mxu0 0.0
    %243 = vmatpush1.msra.mxu0 0.0
    %244 = vmatprep.subr.mxu0 0.0
    %245 = vmatpush1.msra.mxu0 0.0
    %246 = vmatprep.subr.mxu0 0.0
    %247 = vmatpush1.msra.mxu0 0.0
    %248 = vmatprep.subr.mxu0 0.0
    %249 = vmatpush1.msra.mxu0 0.0
    %250 = vmatprep.subr.mxu0 0.0
    %251 = vmatpush1.msra.mxu0 0.0
    %252 = vmatprep.subr.mxu0 0.0
    %253 = vmatpush1.msra.mxu0 0.0
    %254 = vmatprep.subr.mxu0 0.0
    %255 = vmatpush1.msra.mxu0 0.0
    %256 = vmatprep.subr.mxu0 0.0
    %257 = vmatpush1.msra.mxu0 0.0
    %258 = vmatprep.subr.mxu0 0.0
    %259 = vmatpush1.msra.mxu0 0.0
    %260 = vmatprep.subr.mxu0 0.0
    %261 = vmatpush1.msra.mxu0 0.0
    %262 = vmatprep.subr.mxu0 0.0
    %263 = vmatpush1.msra.mxu0 0.0
    %264 = vmatprep.subr.mxu0 0.0
    %265 = vmatpush1.msra.mxu0 0.0
    %266 = vmatprep.subr.mxu0 0.0
    %267 = vmatpush1.msra.mxu0 0.0
    %268 = vmatprep.subr.mxu0 0.0
    %269 = vmatpush1.msra.mxu0 0.0
    %270 = vmatprep.subr.mxu0 0.0
    %271 = vmatpush1.msra.mxu0 0.0
    %272 = vmatprep.subr.mxu0 0.0
    %273 = vmatpush1.msra.mxu0 0.0
    %274 = vmatprep.subr.mxu0 0.0
    %275 = vmatpush1.msra.mxu0 0.0
    %276 = vmatprep.subr.mxu0 0.0
    %277 = vmatpush1.msra.mxu0 0.0
    %278 = vmatprep.mubr.f32.mxu0 0.0
    %279 = vmatmul.mubr.f32.gmra.mrb[0].mxu0 %v208
    %v280 = vpop.f32.mrb[0].mxu0
    %v281 = vadd.f32 0.0, %v280
    %v282 = vpop.f32.mrb[0].mxu0
    %283 = vdwg.mxu0
    %v292 = vlaneseq
    %v293 = vshrl.u32 %v292, 7
    %v294 = vsub.s32 %v160, %v293
    %v295 = vrot.slane %v70, %v294
    %v296 = vlaneseq
    %v297 = vshrl.u32 %v296, 7
    %v298 = vsub.s32 %v160, %v297
    %v299 = vrot.slane %v73, %v298
    %v300 = vlaneseq
    %v301 = vshrl.u32 %v300, 7
    %v302 = vsub.s32 %v160, %v301
    %v303 = vrot.slane %v76, %v302
    %v304 = vlaneseq
    %v305 = vshrl.u32 %v304, 7
    %v306 = vsub.s32 %v160, %v305
    %v307 = vrot.slane %v79, %v306
    %v308 = vlaneseq
    %v309 = vshrl.u32 %v308, 7
    %v310 = vsub.s32 %v160, %v309
    %v311 = vrot.slane %v82, %v310
    %v312 = vlaneseq
    %v313 = vshrl.u32 %v312, 7
    %v314 = vsub.s32 %v160, %v313
    %v315 = vrot.slane %v85, %v314
    %v316 = vlaneseq
    %v317 = vshrl.u32 %v316, 7
    %v318 = vsub.s32 %v160, %v317
    %v319 = vrot.slane %v88, %v318
    %v320 = vlaneseq
    %v321 = vshrl.u32 %v320, 7
    %v322 = vsub.s32 %v160, %v321
    %v323 = vrot.slane %v91, %v322
    %v324 = vsel %vm193, %v299, %v295
    %v325 = vsel %vm195, %v303, %v324
    %v326 = vsel %vm197, %v307, %v325
    %v327 = vsel %vm199, %v311, %v326
    %v328 = vsel %vm201, %v315, %v327
    %v329 = vsel %vm203, %v319, %v328
    %v330 = vsel %vm205, %v323, %v329
    %v331 = vsel %vm207, %v330, 0
    %v334 = vsel %vm210, %v92, 0
    %336 = vmatprep.subr.mxu0 0.0
    %337 = vmatpush1.msra.mxu0 %v334
    %338 = vmatprep.subr.mxu0 0.0
    %339 = vmatpush1.msra.mxu0 0.0
    %340 = vmatprep.subr.mxu0 0.0
    %341 = vmatpush1.msra.mxu0 0.0
    %342 = vmatprep.subr.mxu0 0.0
    %343 = vmatpush1.msra.mxu0 0.0
    %344 = vmatprep.subr.mxu0 0.0
    %345 = vmatpush1.msra.mxu0 0.0
    %346 = vmatprep.subr.mxu0 0.0
    %347 = vmatpush1.msra.mxu0 0.0
    %348 = vmatprep.subr.mxu0 0.0
    %349 = vmatpush1.msra.mxu0 0.0
    %350 = vmatprep.subr.mxu0 0.0
    %351 = vmatpush1.msra.mxu0 0.0
    %352 = vmatprep.subr.mxu0 0.0
    %353 = vmatpush1.msra.mxu0 0.0
    %354 = vmatprep.subr.mxu0 0.0
    %355 = vmatpush1.msra.mxu0 0.0
    %356 = vmatprep.subr.mxu0 0.0
    %357 = vmatpush1.msra.mxu0 0.0
    %358 = vmatprep.subr.mxu0 0.0
    %359 = vmatpush1.msra.mxu0 0.0
    %360 = vmatprep.subr.mxu0 0.0
    %361 = vmatpush1.msra.mxu0 0.0
    %362 = vmatprep.subr.mxu0 0.0
    %363 = vmatpush1.msra.mxu0 0.0
    %364 = vmatprep.subr.mxu0 0.0
    %365 = vmatpush1.msra.mxu0 0.0
    %366 = vmatprep.subr.mxu0 0.0
    %367 = vmatpush1.msra.mxu0 0.0
    %368 = vmatprep.subr.mxu0 0.0
    %369 = vmatpush1.msra.mxu0 0.0
    %370 = vmatprep.subr.mxu0 0.0
    %371 = vmatpush1.msra.mxu0 0.0
    %372 = vmatprep.subr.mxu0 0.0
    %373 = vmatpush1.msra.mxu0 0.0
    %374 = vmatprep.subr.mxu0 0.0
    %375 = vmatpush1.msra.mxu0 0.0
    %376 = vmatprep.subr.mxu0 0.0
    %377 = vmatpush1.msra.mxu0 0.0
    %378 = vmatprep.subr.mxu0 0.0
    %379 = vmatpush1.msra.mxu0 0.0
    %380 = vmatprep.subr.mxu0 0.0
    %381 = vmatpush1.msra.mxu0 0.0
    %382 = vmatprep.subr.mxu0 0.0
    %383 = vmatpush1.msra.mxu0 0.0
    %384 = vmatprep.subr.mxu0 0.0
    %385 = vmatpush1.msra.mxu0 0.0
    %386 = vmatprep.subr.mxu0 0.0
    %387 = vmatpush1.msra.mxu0 0.0
    %388 = vmatprep.subr.mxu0 0.0
    %389 = vmatpush1.msra.mxu0 0.0
    %390 = vmatprep.subr.mxu0 0.0
    %391 = vmatpush1.msra.mxu0 0.0
    %392 = vmatprep.subr.mxu0 0.0
    %393 = vmatpush1.msra.mxu0 0.0
    %394 = vmatprep.subr.mxu0 0.0
    %395 = vmatpush1.msra.mxu0 0.0
    %396 = vmatprep.subr.mxu0 0.0
    %397 = vmatpush1.msra.mxu0 0.0
    %398 = vmatprep.subr.mxu0 0.0
    %399 = vmatpush1.msra.mxu0 0.0
    %400 = vmatprep.mubr.f32.mxu0 0.0
    %401 = vmatmul.mubr.f32.gmra.mrb[0].mxu0 %v331
    %v402 = vpop.f32.mrb[0].mxu0
    %v403 = vadd.f32 %v281, %v402
    %v404 = vpop.f32.mrb[0].mxu0
    %405 = vdwg.mxu0
    %406 = vrot.lane.b32.xlu0 %v59, 126
    %v407 = vpop.permute.xlu0 %406
    %408 = vrot.lane.b32.xlu0 %v60, 126
    %v409 = vpop.permute.xlu0 %408
    %410 = vrot.lane.b32.xlu0 %v61, 126
    %v411 = vpop.permute.xlu0 %410
    %412 = vrot.lane.b32.xlu0 %v62, 126
    %v413 = vpop.permute.xlu0 %412
    %414 = vrot.lane.b32.xlu0 %v63, 126
    %v415 = vpop.permute.xlu0 %414
    %416 = vrot.lane.b32.xlu0 %v64, 126
    %v417 = vpop.permute.xlu0 %416
    %418 = vrot.lane.b32.xlu0 %v65, 126
    %v419 = vpop.permute.xlu0 %418
    %420 = vrot.lane.b32.xlu0 %v66, 126
    %v421 = vpop.permute.xlu0 %420
    %v430 = vsel %vm67, %v407, 0.0
    %431 = vadd.xlane.f32.xlu0 %v430
    %v432 = vpop.xlane.xlu0 %431
    %v433 = vsel %vm67, %v409, 0.0
    %434 = vadd.xlane.f32.xlu0 %v433
    %v435 = vpop.xlane.xlu0 %434
    %v436 = vsel %vm67, %v411, 0.0
    %437 = vadd.xlane.f32.xlu0 %v436
    %v438 = vpop.xlane.xlu0 %437
    %v439 = vsel %vm67, %v413, 0.0
    %440 = vadd.xlane.f32.xlu0 %v439
    %v441 = vpop.xlane.xlu0 %440
    %v442 = vsel %vm67, %v415, 0.0
    %443 = vadd.xlane.f32.xlu0 %v442
    %v444 = vpop.xlane.xlu0 %443
    %v445 = vsel %vm67, %v417, 0.0
    %446 = vadd.xlane.f32.xlu0 %v445
    %v447 = vpop.xlane.xlu0 %446
    %v448 = vsel %vm67, %v419, 0.0
    %449 = vadd.xlane.f32.xlu0 %v448
    %v450 = vpop.xlane.xlu0 %449
    %v451 = vsel %vm67, %v421, 0.0
    %452 = vadd.xlane.f32.xlu0 %v451
    %v453 = vpop.xlane.xlu0 %452
    %s454 = scalar_lea.vmem [#allocation5], 8
    %v455 = vld [vmem:[%s454] sm:$0xf]
    %v464 = vlaneseq
    %v465 = vshrl.u32 %v464, 7
    %v466 = vsub.s32 %v160, %v465
    %v467 = vrot.slane %v432, %v466
    %v468 = vlaneseq
    %v469 = vshrl.u32 %v468, 7
    %v470 = vsub.s32 %v160, %v469
    %v471 = vrot.slane %v435, %v470
    %v472 = vlaneseq
    %v473 = vshrl.u32 %v472, 7
    %v474 = vsub.s32 %v160, %v473
    %v475 = vrot.slane %v438, %v474
    %v476 = vlaneseq
    %v477 = vshrl.u32 %v476, 7
    %v478 = vsub.s32 %v160, %v477
    %v479 = vrot.slane %v441, %v478
    %v480 = vlaneseq
    %v481 = vshrl.u32 %v480, 7
    %v482 = vsub.s32 %v160, %v481
    %v483 = vrot.slane %v444, %v482
    %v484 = vlaneseq
    %v485 = vshrl.u32 %v484, 7
    %v486 = vsub.s32 %v160, %v485
    %v487 = vrot.slane %v447, %v486
    %v488 = vlaneseq
    %v489 = vshrl.u32 %v488, 7
    %v490 = vsub.s32 %v160, %v489
    %v491 = vrot.slane %v450, %v490
    %v492 = vlaneseq
    %v493 = vshrl.u32 %v492, 7
    %v494 = vsub.s32 %v160, %v493
    %v495 = vrot.slane %v453, %v494
    %v496 = vsel %vm193, %v471, %v467
    %v497 = vsel %vm195, %v475, %v496
    %v498 = vsel %vm197, %v479, %v497
    %v499 = vsel %vm199, %v483, %v498
    %v500 = vsel %vm201, %v487, %v499
    %v501 = vsel %vm203, %v491, %v500
    %v502 = vsel %vm205, %v495, %v501
    %v503 = vsel %vm207, %v502, 0
    %v506 = vsel %vm210, %v455, 0
    %508 = vmatprep.subr.mxu0 0.0
    %509 = vmatpush1.msra.mxu0 %v506
    %510 = vmatprep.subr.mxu0 0.0
    %511 = vmatpush1.msra.mxu0 0.0
    %512 = vmatprep.subr.mxu0 0.0
    %513 = vmatpush1.msra.mxu0 0.0
    %514 = vmatprep.subr.mxu0 0.0
    %515 = vmatpush1.msra.mxu0 0.0
    %516 = vmatprep.subr.mxu0 0.0
    %517 = vmatpush1.msra.mxu0 0.0
    %518 = vmatprep.subr.mxu0 0.0
    %519 = vmatpush1.msra.mxu0 0.0
    %520 = vmatprep.subr.mxu0 0.0
    %521 = vmatpush1.msra.mxu0 0.0
    %522 = vmatprep.subr.mxu0 0.0
    %523 = vmatpush1.msra.mxu0 0.0
    %524 = vmatprep.subr.mxu0 0.0
    %525 = vmatpush1.msra.mxu0 0.0
    %526 = vmatprep.subr.mxu0 0.0
    %527 = vmatpush1.msra.mxu0 0.0
    %528 = vmatprep.subr.mxu0 0.0
    %529 = vmatpush1.msra.mxu0 0.0
    %530 = vmatprep.subr.mxu0 0.0
    %531 = vmatpush1.msra.mxu0 0.0
    %532 = vmatprep.subr.mxu0 0.0
    %533 = vmatpush1.msra.mxu0 0.0
    %534 = vmatprep.subr.mxu0 0.0
    %535 = vmatpush1.msra.mxu0 0.0
    %536 = vmatprep.subr.mxu0 0.0
    %537 = vmatpush1.msra.mxu0 0.0
    %538 = vmatprep.subr.mxu0 0.0
    %539 = vmatpush1.msra.mxu0 0.0
    %540 = vmatprep.subr.mxu0 0.0
    %541 = vmatpush1.msra.mxu0 0.0
    %542 = vmatprep.subr.mxu0 0.0
    %543 = vmatpush1.msra.mxu0 0.0
    %544 = vmatprep.subr.mxu0 0.0
    %545 = vmatpush1.msra.mxu0 0.0
    %546 = vmatprep.subr.mxu0 0.0
    %547 = vmatpush1.msra.mxu0 0.0
    %548 = vmatprep.subr.mxu0 0.0
    %549 = vmatpush1.msra.mxu0 0.0
    %550 = vmatprep.subr.mxu0 0.0
    %551 = vmatpush1.msra.mxu0 0.0
    %552 = vmatprep.subr.mxu0 0.0
    %553 = vmatpush1.msra.mxu0 0.0
    %554 = vmatprep.subr.mxu0 0.0
    %555 = vmatpush1.msra.mxu0 0.0
    %556 = vmatprep.subr.mxu0 0.0
    %557 = vmatpush1.msra.mxu0 0.0
    %558 = vmatprep.subr.mxu0 0.0
    %559 = vmatpush1.msra.mxu0 0.0
    %560 = vmatprep.subr.mxu0 0.0
    %561 = vmatpush1.msra.mxu0 0.0
    %562 = vmatprep.subr.mxu0 0.0
    %563 = vmatpush1.msra.mxu0 0.0
    %564 = vmatprep.subr.mxu0 0.0
    %565 = vmatpush1.msra.mxu0 0.0
    %566 = vmatprep.subr.mxu0 0.0
    %567 = vmatpush1.msra.mxu0 0.0
    %568 = vmatprep.subr.mxu0 0.0
    %569 = vmatpush1.msra.mxu0 0.0
    %570 = vmatprep.subr.mxu0 0.0
    %571 = vmatpush1.msra.mxu0 0.0
    %572 = vmatprep.mubr.f32.mxu0 0.0
    %573 = vmatmul.mubr.f32.gmra.mrb[0].mxu0 %v503
    %v574 = vpop.f32.mrb[0].mxu0
    %v575 = vadd.f32 0.0, %v574
    %v576 = vpop.f32.mrb[0].mxu0
    %577 = vdwg.mxu0
    %v578 = vadd.f32 %v403, %v575
    %v579 = vld [vmem:[#allocation7] sm:$0xff]
    %v580 = vld [vmem:[#allocation7 + $0x8] sm:$0xff]
    %v581 = vld [vmem:[#allocation7 + $0x10] sm:$0xff]
    %v582 = vld [vmem:[#allocation7 + $0x18] sm:$0xff]
    %v583 = vld [vmem:[#allocation7 + $0x20] sm:$0xff]
    %v584 = vld [vmem:[#allocation7 + $0x28] sm:$0xff]
    %v585 = vld [vmem:[#allocation7 + $0x30] sm:$0xff]
    %v586 = vld [vmem:[#allocation7 + $0x38] sm:$0xff]
    %v587 = vld [vmem:[#allocation7 + $0x40] sm:$0xff]
    %v588 = vld [vmem:[#allocation7 + $0x48] sm:$0xff]
    %v589 = vld [vmem:[#allocation7 + $0x50] sm:$0xff]
    %v590 = vld [vmem:[#allocation7 + $0x58] sm:$0xff]
    %v591 = vld [vmem:[#allocation7 + $0x60] sm:$0xff]
    %v592 = vld [vmem:[#allocation7 + $0x68] sm:$0xff]
    %v593 = vld [vmem:[#allocation7 + $0x70] sm:$0xff]
    %v594 = vld [vmem:[#allocation7 + $0x78] sm:$0xff]
    %v595 = vld [vmem:[%s3] sm:$0x1]
    %v597 = vlaneseq
    %v598 = vshrl.u32 %v597, 7
    %v599 = vsub.s32 0, %v598
    %v600 = vrot.slane %v595, %v599
    %602 = vmatprep.subr.mxu0 0.0
    %603 = vmatpush1.msra.mxu0 %v579
    %604 = vmatprep.subr.mxu0 0.0
    %605 = vmatpush1.msra.mxu0 %v580
    %606 = vmatprep.subr.mxu0 0.0
    %607 = vmatpush1.msra.mxu0 %v581
    %608 = vmatprep.subr.mxu0 0.0
    %609 = vmatpush1.msra.mxu0 %v582
    %610 = vmatprep.subr.mxu0 0.0
    %611 = vmatpush1.msra.mxu0 %v583
    %612 = vmatprep.subr.mxu0 0.0
    %613 = vmatpush1.msra.mxu0 %v584
    %614 = vmatprep.subr.mxu0 0.0
    %615 = vmatpush1.msra.mxu0 %v585
    %616 = vmatprep.subr.mxu0 0.0
    %617 = vmatpush1.msra.mxu0 %v586
    %618 = vmatprep.subr.mxu0 0.0
    %619 = vmatpush1.msra.mxu0 %v587
    %620 = vmatprep.subr.mxu0 0.0
    %621 = vmatpush1.msra.mxu0 %v588
    %622 = vmatprep.subr.mxu0 0.0
    %623 = vmatpush1.msra.mxu0 %v589
    %624 = vmatprep.subr.mxu0 0.0
    %625 = vmatpush1.msra.mxu0 %v590
    %626 = vmatprep.subr.mxu0 0.0
    %627 = vmatpush1.msra.mxu0 %v591
    %628 = vmatprep.subr.mxu0 0.0
    %629 = vmatpush1.msra.mxu0 %v592
    %630 = vmatprep.subr.mxu0 0.0
    %631 = vmatpush1.msra.mxu0 %v593
    %632 = vmatprep.subr.mxu0 0.0
    %633 = vmatpush1.msra.mxu0 %v594
    %634 = vmatprep.subr.mxu0 0.0
    %635 = vmatpush1.msra.mxu0 0.0
    %636 = vmatprep.subr.mxu0 0.0
    %637 = vmatpush1.msra.mxu0 0.0
    %638 = vmatprep.subr.mxu0 0.0
    %639 = vmatpush1.msra.mxu0 0.0
    %640 = vmatprep.subr.mxu0 0.0
    %641 = vmatpush1.msra.mxu0 0.0
    %642 = vmatprep.subr.mxu0 0.0
    %643 = vmatpush1.msra.mxu0 0.0
    %644 = vmatprep.subr.mxu0 0.0
    %645 = vmatpush1.msra.mxu0 0.0
    %646 = vmatprep.subr.mxu0 0.0
    %647 = vmatpush1.msra.mxu0 0.0
    %648 = vmatprep.subr.mxu0 0.0
    %649 = vmatpush1.msra.mxu0 0.0
    %650 = vmatprep.subr.mxu0 0.0
    %651 = vmatpush1.msra.mxu0 0.0
    %652 = vmatprep.subr.mxu0 0.0
    %653 = vmatpush1.msra.mxu0 0.0
    %654 = vmatprep.subr.mxu0 0.0
    %655 = vmatpush1.msra.mxu0 0.0
    %656 = vmatprep.subr.mxu0 0.0
    %657 = vmatpush1.msra.mxu0 0.0
    %658 = vmatprep.subr.mxu0 0.0
    %659 = vmatpush1.msra.mxu0 0.0
    %660 = vmatprep.subr.mxu0 0.0
    %661 = vmatpush1.msra.mxu0 0.0
    %662 = vmatprep.subr.mxu0 0.0
    %663 = vmatpush1.msra.mxu0 0.0
    %664 = vmatprep.subr.mxu0 0.0
    %665 = vmatpush1.msra.mxu0 0.0
    %666 = vmatprep.mubr.f32.mxu0 0.0
    %667 = vmatmul.mubr.f32.gmra.mrb[0].mxu0 %v578
    %v668 = vpop.f32.mrb[0].mxu0
    %v669 = vadd.f32 %v600, %v668
    %v670 = vpop.f32.mrb[0].mxu0
    %671 = vdwg.mxu0
    %672 = vst [vmem:[#allocation8] sm:$0xff] %v669
    // Predicated region
    $region30: #{tpu_custom_call.1} parent=1 // pred_check
      _
    $region31: #{tpu_custom_call.1} parent=1 // pred_check_branch
      %674 = sbr.rel (0) target = $region33
    $region32: #{tpu_custom_call.1} parent=1 // pred_region
      %s676 = ssub.s32 128, 128
      %677 = vsyncadd [#allocation4], %s676
      %s679 = sshll.u32 [#allocation8], 4
      %s680 = int_to_ptr.vmem [resolvable:$true] %s679
      %682 = dma.vmem_to_hbm [thread:$0]  %s680, 128, %s4, [#allocation4]
    $region33: #{tpu_custom_call.1} parent=1 // pred_fallthru
      _
    // Predicated region
    $region34: #{tpu_custom_call.1} parent=1 // pred_check
      _
    $region35: #{tpu_custom_call.1} parent=1 // pred_check_branch
      %684 = sbr.rel (0) target = $region37
    $region36: #{tpu_custom_call.1} parent=1 // pred_region
      %685 = dma.done [#allocation4], 128
    $region37: #{tpu_custom_call.1} parent=1 // pred_fallthru
      _
    %686 = vsyncpa [#allocation3], 1
    %687 = vsyncpa [#allocation6], 1
    %688 = vsyncpa [#allocation4], 1

</llo_original>
